<compile_context>
chip_gen: v5e
topology: v5e:2x2
jax: 0.10.0
libtpu: 0.0.40
codegen_flags: <defaults>
</compile_context>

<pallas_src>
import functools

import jax
import jax.numpy as jnp
from jax.experimental import pallas as pl
from jax.experimental.pallas import tpu as pltpu


def dc_kernel(x_ref, w1_ref, b1_ref, w2_ref, b2_ref, out_ref, *, matmul_dtype):
    """One grid step = (batch tile, row tile); everything transposed (rows on lanes).

    Ref shapes:
      x_ref   (BT, D, T)     x[b].T for BT batch elements (rows on lanes)
      w1_ref  (BT, D*H, D)   per-batch mask^3-folded lin1 weights (transposed)
      b1_ref  (D*H, 1)       packed lin1 biases (column vector)
      w2_ref  (D, D*H)       block-packed lin2 weights (row v = variable v)
      b2_ref  (D, 1)         packed lin2 biases
      out_ref (BT, D, T)     transposed output
    """
    b1 = b1_ref[...]                                    # (D*H, 1) f32
    b2 = b2_ref[...]                                    # (D, 1)   f32
    w2 = w2_ref[...].astype(matmul_dtype)               # (D, D*H)

    # Static (fully unrolled) loop over the batch tile: indices are
    # compile-time, so ref[b] is a zero-cost view.
    for b in range(x_ref.shape[0]):
        x3 = x_ref[b] ** 3                              # (D, T)  f32 VPU
        h = jnp.tanh(
            jnp.dot(w1_ref[b].astype(matmul_dtype), x3.astype(matmul_dtype),
                    preferred_element_type=jnp.float32) + b1)    # (D*H, T) f32
        out = jnp.dot(w2, h.astype(matmul_dtype),
                      preferred_element_type=jnp.float32) + b2   # (D, T)  f32
        out_ref[b] = out.astype(out_ref.dtype)


def _choose_tiles(bs, steps):
    """Pick (batch_tile, row_tile, n_row_tiles) from static shapes."""
    # Rows (= steps) live on the lane axis; a tile must be the full extent or
    # a multiple of 128.  VMEM is a non-issue at these sizes.
    row_tile = steps if steps <= 1024 else 1024
    n_row_tiles = pl.cdiv(steps, row_tile)

    # Fold several batch elements into one grid step when the row tile is
    # small (amortizes the ~0.35us per-grid-step overhead).
    batch_tile = int(min(bs, max(1, 1024 // max(row_tile, 1))))

    # ... but keep >= 2 grid steps when possible so both v7x TCs get work.
    if batch_tile > 1 and pl.cdiv(bs, batch_tile) * n_row_tiles < 2:
        batch_tile = pl.cdiv(bs, 2)
    if (pl.cdiv(bs, batch_tile) * n_row_tiles < 2 and n_row_tiles == 1
            and steps >= 256 and steps % 256 == 0):
        row_tile, n_row_tiles = steps // 2, 2           # stays a multiple of 128
    return batch_tile, row_tile, n_row_tiles


@functools.partial(jax.jit, static_argnames=("matmul_dtype",))
def dc_forward(x, mask, w1_s, b1_s, w2_s, b2_s, *, matmul_dtype=jnp.bfloat16):
    """x: (bs, steps, D) or (bs, D); mask: (bs, D, D); *_s: regime-selected params.

    w1_s (D, D, H), b1_s (D, H), w2_s (D, H), b2_s (D,)."""
    squeeze_steps = x.ndim == 2
    if squeeze_steps:
        x = x[:, None, :]
    bs, steps, num_vars = x.shape
    num_hidden = w1_s.shape[-1]
    dh = num_vars * num_hidden

    # ---- plain-JAX layout plumbing / algebraic mask fold (tiny arrays) ----
    # w1_eff[b, v*H+h, d] = mask[b,v,d]^3 * w1_s[v,d,h]
    w1_eff = jnp.einsum('bvd,vdh->bvhd', mask.astype(jnp.float32) ** 3,
                        w1_s).reshape(bs, dh, num_vars)
    b1_col = b1_s.reshape(dh, 1)
    eye = jnp.eye(num_vars, dtype=w2_s.dtype)
    # w2t[w, v*H+h] = (v == w) * w2_s[v, h]
    w2t = jnp.einsum('vh,vw->wvh', w2_s, eye).reshape(num_vars, dh)
    b2_col = b2_s.reshape(num_vars, 1)
    x_t = jnp.swapaxes(x, 1, 2)                         # (bs, D, steps) lane-dense

    batch_tile, row_tile, n_row_tiles = _choose_tiles(bs, steps)
    grid = (pl.cdiv(bs, batch_tile), n_row_tiles)

    kernel = functools.partial(dc_kernel, matmul_dtype=matmul_dtype)

    out_t = pl.pallas_call(
        kernel,
        out_shape=jax.ShapeDtypeStruct((bs, num_vars, steps), x.dtype),
        grid_spec=pltpu.PrefetchScalarGridSpec(
            num_scalar_prefetch=0,
            grid=grid,
            in_specs=[
                pl.BlockSpec((batch_tile, num_vars, row_tile),
                             lambda b, r: (b, 0, r)),
                pl.BlockSpec((batch_tile, dh, num_vars),
                             lambda b, r: (b, 0, 0)),
                pl.BlockSpec((dh, 1), lambda b, r: (0, 0)),
                pl.BlockSpec((num_vars, dh), lambda b, r: (0, 0)),
                pl.BlockSpec((num_vars, 1), lambda b, r: (0, 0)),
            ],
            out_specs=pl.BlockSpec((batch_tile, num_vars, row_tile),
                                   lambda b, r: (b, 0, r)),
        ),
        compiler_params=pltpu.CompilerParams(
            dimension_semantics=("parallel", "parallel")),
    )(x_t, w1_eff, b1_col, w2t, b2_col)

    out = jnp.swapaxes(out_t, 1, 2)                     # back to (bs, steps, D)
    if squeeze_steps:
        out = out[:, 0, :]
    return out


def init_params(key, num_vars, num_hidden, num_regimes):
    """PyTorch-Linear-style uniform init, stacked over (var, regime).

    lin1 weight stored transposed as (in=D, out=H); lin2 weight as (H,)."""
    k1, k2, k3, k4 = jax.random.split(key, 4)
    bound1 = 1.0 / jnp.sqrt(num_vars)
    bound2 = 1.0 / jnp.sqrt(num_hidden)
    w1 = jax.random.uniform(k1, (num_vars, num_regimes, num_vars, num_hidden),
                            jnp.float32, -bound1, bound1)
    b1 = jax.random.uniform(k2, (num_vars, num_regimes, num_hidden),
                            jnp.float32, -bound1, bound1)
    w2 = jax.random.uniform(k3, (num_vars, num_regimes, num_hidden),
                            jnp.float32, -bound2, bound2)
    b2 = jax.random.uniform(k4, (num_vars, num_regimes),
                            jnp.float32, -bound2, bound2)
    return w1, b1, w2, b2


def select_params(w1, b1, w2, b2, interv):
    """Pick regime interv[v] for each variable v (glue, plain JAX)."""
    vidx = jnp.arange(w1.shape[0])
    return w1[vidx, interv], b1[vidx, interv], w2[vidx, interv], b2[vidx, interv]


def reference_forward(x, mask, w1, b1, w2, b2, interv):
    """Pure-JAX reference mirroring the PyTorch forward (no packing/folding)."""
    num_vars = x.shape[-1]
    ys = []
    for v in range(num_vars):
        r = int(interv[v])
        masked = jnp.einsum('btd,bd->btd', x, mask[:, v])
        h = jnp.tanh(jnp.einsum('btd,dh->bth', masked ** 3, w1[v, r]) + b1[v, r])
        o = jnp.einsum('bth,h->bt', h, w2[v, r]) + b2[v, r]
        ys.append(o[..., None])
    return jnp.concatenate(ys, axis=-1)


if __name__ == "__main__":
    num_vars, num_hidden, num_regimes = 4, 32, 3
    bs, steps = 2, 8

    key = jax.random.PRNGKey(0)
    kx, km, kp = jax.random.split(key, 3)

    x = jax.random.normal(kx, (bs, steps, num_vars), jnp.float32)

    # TODO(synk): GumbelAdjacency is not defined in the spec; use a
    # deterministic sigmoid(adjacency logits) sample in place of Gumbel sampling.
    mask = jax.nn.sigmoid(jax.random.normal(km, (bs, num_vars, num_vars),
                                            jnp.float32))

    w1, b1, w2, b2 = init_params(kp, num_vars, num_hidden, num_regimes)

    # DC.__init__ sets interv = zeros(num_vars) -> regime 0 for every variable.
    interv = jnp.zeros((num_vars,), jnp.int32)
    w1_s, b1_s, w2_s, b2_s = select_params(w1, b1, w2, b2, interv)

    ref = reference_forward(x, mask, w1, b1, w2, b2, interv)

    # Default path: bf16 MXU operands (recommended on v5e/v6e/v7x), f32
    # accumulation and f32 elementwise math.
    out = jax.block_until_ready(dc_forward(x, mask, w1_s, b1_s, w2_s, b2_s))
    assert out.shape == (bs, steps, num_vars)
    assert float(jnp.max(jnp.abs(out - ref))) < 1e-1, "bf16 path mismatch vs reference"

    # f32-matmul path for a tight numerical check of the packing / mask fold.
    out_f32 = jax.block_until_ready(
        dc_forward(x, mask, w1_s, b1_s, w2_s, b2_s, matmul_dtype=jnp.float32))
    assert jnp.allclose(out_f32, ref, atol=1e-4, rtol=1e-4), \
        "f32 path mismatch vs reference"

    print("KERNEL_OK")
</pallas_src>

<mosaic_0001>
module attributes {stable_mosaic.version = 11 : i64} {
  func.func @dc_kernel(%arg0: i32, %arg1: i32, %arg2: memref<1x4x8xf32, #tpu.memory_space<vmem>>, %arg3: memref<1x128x4xf32, #tpu.memory_space<vmem>>, %arg4: memref<128x1xf32, #tpu.memory_space<vmem>>, %arg5: memref<4x128xf32, #tpu.memory_space<vmem>>, %arg6: memref<4x1xf32, #tpu.memory_space<vmem>>, %arg7: memref<1x4x8xf32, #tpu.memory_space<vmem>>) attributes {dimension_semantics = [#tpu.dimension_semantics<parallel>, #tpu.dimension_semantics<parallel>], iteration_bounds = array<i64: 2, 1>, scalar_prefetch = 0 : i64, scratch_operands = 0 : i64, tpu.core_type = #tpu.core_type<tc>, window_params = [{transform_indices = @transform_0, window_bounds = array<i64: 1, 4, 8>}, {transform_indices = @transform_1, window_bounds = array<i64: 1, 128, 4>}, {pipeline_mode = #tpu.pipeline_mode<synchronous>, transform_indices = @transform_2, window_bounds = array<i64: 128, 1>}, {pipeline_mode = #tpu.pipeline_mode<synchronous>, transform_indices = @transform_3, window_bounds = array<i64: 4, 128>}, {pipeline_mode = #tpu.pipeline_mode<synchronous>, transform_indices = @transform_4, window_bounds = array<i64: 4, 1>}, {transform_indices = @transform_5, window_bounds = array<i64: 1, 4, 8>}]} {
    %c0 = arith.constant 0 : index
    %c0_0 = arith.constant 0 : index
    %0 = vector.load %arg4[%c0, %c0_0] : memref<128x1xf32, #tpu.memory_space<vmem>>, vector<128x1xf32>
    %c0_1 = arith.constant 0 : index
    %c0_2 = arith.constant 0 : index
    %1 = vector.load %arg6[%c0_1, %c0_2] : memref<4x1xf32, #tpu.memory_space<vmem>>, vector<4x1xf32>
    %c0_3 = arith.constant 0 : index
    %c0_4 = arith.constant 0 : index
    %2 = vector.load %arg5[%c0_3, %c0_4] : memref<4x128xf32, #tpu.memory_space<vmem>>, vector<4x128xf32>
    %3 = arith.truncf %2 : vector<4x128xf32> to vector<4x128xbf16>
    %c0_5 = arith.constant 0 : index
    %c0_6 = arith.constant 0 : index
    %c0_7 = arith.constant 0 : index
    %4 = vector.load %arg2[%c0_5, %c0_6, %c0_7] : memref<1x4x8xf32, #tpu.memory_space<vmem>>, vector<1x4x8xf32>
    %5 = vector.shape_cast %4 : vector<1x4x8xf32> to vector<4x8xf32>
    %6 = arith.mulf %5, %5 : vector<4x8xf32>
    %7 = arith.mulf %5, %6 : vector<4x8xf32>
    %c0_8 = arith.constant 0 : index
    %c0_9 = arith.constant 0 : index
    %c0_10 = arith.constant 0 : index
    %8 = vector.load %arg3[%c0_8, %c0_9, %c0_10] : memref<1x128x4xf32, #tpu.memory_space<vmem>>, vector<1x128x4xf32>
    %9 = vector.shape_cast %8 : vector<1x128x4xf32> to vector<128x4xf32>
    %10 = arith.truncf %9 : vector<128x4xf32> to vector<128x4xbf16>
    %11 = arith.truncf %7 : vector<4x8xf32> to vector<4x8xbf16>
    %cst = arith.constant dense<0.000000e+00> : vector<128x8xf32>
    %12 = tpu.matmul %10, %11, %cst {dimension_numbers = #tpu.dot_dimension_numbers<[1], [0], [0], [1], [0, 0, 1, 1], [], []>} : vector<128x4xbf16>, vector<4x8xbf16>, vector<128x8xf32> -> vector<128x8xf32>
    %13 = vector.broadcast %0 : vector<128x1xf32> to vector<128x8xf32>
    %14 = arith.addf %12, %13 : vector<128x8xf32>
    %15 = math.tanh %14 : vector<128x8xf32>
    %16 = arith.truncf %15 : vector<128x8xf32> to vector<128x8xbf16>
    %cst_11 = arith.constant dense<0.000000e+00> : vector<4x8xf32>
    %17 = tpu.matmul %3, %16, %cst_11 {dimension_numbers = #tpu.dot_dimension_numbers<[1], [0], [0], [1], [0, 0, 1, 1], [], []>} : vector<4x128xbf16>, vector<128x8xbf16>, vector<4x8xf32> -> vector<4x8xf32>
    %18 = vector.broadcast %1 : vector<4x1xf32> to vector<4x8xf32>
    %19 = arith.addf %17, %18 : vector<4x8xf32>
    %c0_12 = arith.constant 0 : index
    %c0_13 = arith.constant 0 : index
    %c0_14 = arith.constant 0 : index
    %20 = vector.load %arg7[%c0_12, %c0_13, %c0_14] : memref<1x4x8xf32, #tpu.memory_space<vmem>>, vector<1x4x8xf32>
    %21 = vector.shape_cast %20 : vector<1x4x8xf32> to vector<4x8xf32>
    %22 = vector.shape_cast %19 : vector<4x8xf32> to vector<1x4x8xf32>
    tpu.vector_store %arg7[%c0_12, %c0_13, %c0_14], %22 {strides = array<i32>} : memref<1x4x8xf32, #tpu.memory_space<vmem>>, vector<1x4x8xf32>,
    return
  }
  func.func @transform_0(%arg0: i32, %arg1: i32) -> (i32, i32, i32) {
    %c0_i32 = arith.constant 0 : i32
    %c0_i32_0 = arith.constant 0 : i32
    return %arg0, %c0_i32, %arg1 : i32, i32, i32
  }
  func.func @transform_1(%arg0: i32, %arg1: i32) -> (i32, i32, i32) {
    %c0_i32 = arith.constant 0 : i32
    %c0_i32_0 = arith.constant 0 : i32
    %c0_i32_1 = arith.constant 0 : i32
    return %arg0, %c0_i32, %c0_i32_0 : i32, i32, i32
  }
  func.func @transform_2(%arg0: i32, %arg1: i32) -> (i32, i32) {
    %c0_i32 = arith.constant 0 : i32
    %c0_i32_0 = arith.constant 0 : i32
    %c0_i32_1 = arith.constant 0 : i32
    return %c0_i32, %c0_i32_0 : i32, i32
  }
  func.func @transform_3(%arg0: i32, %arg1: i32) -> (i32, i32) {
    %c0_i32 = arith.constant 0 : i32
    %c0_i32_0 = arith.constant 0 : i32
    %c0_i32_1 = arith.constant 0 : i32
    return %c0_i32, %c0_i32_0 : i32, i32
  }
  func.func @transform_4(%arg0: i32, %arg1: i32) -> (i32, i32) {
    %c0_i32 = arith.constant 0 : i32
    %c0_i32_0 = arith.constant 0 : i32
    %c0_i32_1 = arith.constant 0 : i32
    return %c0_i32, %c0_i32_0 : i32, i32
  }
  func.func @transform_5(%arg0: i32, %arg1: i32) -> (i32, i32, i32) {
    %c0_i32 = arith.constant 0 : i32
    %c0_i32_0 = arith.constant 0 : i32
    return %arg0, %c0_i32, %arg1 : i32, i32, i32
  }
}

</mosaic_0001>

<llo_original>
// kernel: dc_forward.1
$region0: #{dc_forward.1}
  #allocation0 [shape = 'u32[]', space=smem, size = 0x4, offset = 0x4, fixed_abs, tag = 'smem constant byte address 0x4 - core index']
  #allocation1 [shape = 'u32[72,128]{1,0:T(1,128)}', space=vmem, size = 0x9000, scoped, tag = 'internal scratch']
  %s0 = inlined_call_operand.vmem [shape: f32[2,4,8], index: 0, kind: input, shape index: {}]
  %s1 = inlined_call_operand.vmem [shape: f32[2,128,4], index: 1, kind: input, shape index: {}]
  %s2 = inlined_call_operand.vmem [shape: f32[128,1], index: 2, kind: input, shape index: {}]
  %s3 = inlined_call_operand.vmem [shape: f32[4,128], index: 3, kind: input, shape index: {}]
  %s4 = inlined_call_operand.vmem [shape: f32[4,1], index: 4, kind: input, shape index: {}]
  %s5 = inlined_call_operand.hbm [shape: f32[2,4,8], index: 5, kind: output, shape index: {}]
  %s6 = sld [smem:[#allocation0]]
  $region53: #{dc_forward.1} parent=0
    _
  %s8 = ssub.s32 1, %s6
  %s9 = scalar_select 0, %s8, %s6
  $region1: #{dc_forward.1} parent=0
    #allocation2 [shape = 'u8[4096]{0}', space=vmem, size = 0x1000, scoped, tag = 'output window, operand 0']
    #allocation3 [shape = 's32[2]{0}', space=sflag, size = 0x8, scoped, tag = 'scoped memory for dc_forward.1']
    %10 = vsyncpa [#allocation3], 0
    %s11 = scalar_lea.sflag [#allocation3], 1
    %12 = vsyncpa %s11, 0
    loop: start=0, step=1, limit=4
    $region2: #{dc_forward.1} parent=1 // loop_pre_header
      _
    $region3: #{dc_forward.1} parent=1 // loop_header
      %s14 = sphi 0, %s18
      %p15 = scmp.ge.s32.totalorder %s14, 4
      %s21 = sphi 0, %s33
      %s22 = sphi 0, %s29
      %s23 = sphi 0, %s21
      %s24 = sphi 0, %s22
      %s25 = sphi 0, %s23
      %s26 = sphi 0, %s24
      %s38 = sphi 0, %s40
      %s41 = sphi 0, %s38
      %s42 = sphi 0, %s41
      %s58 = sphi 0, %s42
      %s64 = sphi 0, %s66
      %s67 = sphi 0, %s64
      %s68 = sphi 0, %s67
      %s84 = sphi 0, %s68
      %s88 = sphi 0, %s88
      %s90 = sphi 0, %s88
      %s91 = sphi 0, %s90
      %s105 = sphi 0, %s91
      %s109 = sphi 0, %s109
      %s111 = sphi 0, %s109
      %s112 = sphi 0, %s111
      %s126 = sphi 0, %s112
      %s130 = sphi 0, %s130
      %s132 = sphi 0, %s130
      %s133 = sphi 0, %s132
      %s147 = sphi 0, %s133
      %s155 = sphi 0, %s157
      %s158 = sphi 0, %s155
      %s159 = sphi 0, %s158
      %s175 = sphi 0, %s159
    $region4: #{dc_forward.1} parent=1 // loop_header_branch
      %17 = sbr.rel (%p15) target = $region8
    $region5: #{dc_forward.1} parent=1 // loop_body
      %s19 = ssub.s32 %s14, 1
      %s20 = ssub.s32 %s14, 2
      %s27 = sadd.s32 1, %s22
      %p28 = scmp.ge.s32.totalorder %s27, 1
      %s29 = scalar_select %p28, 0, %s27
      %s30 = sadd.s32 1, %s21
      %s31 = scalar_select %p28, %s30, %s21
      %p32 = scmp.ge.s32.totalorder %s31, 2
      %s33 = scalar_select %p32, 0, %s31
      %s34 = ssub.s32 %s21, %s33
      %s35 = ssub.s32 %s22, %s29
      %s36 = sor.u32 %s34, %s35
      %p37 = scmp.eq.s32.totalorder %s36, 0
      %s39 = sadd.s32 %s38, 1
      %s40 = scalar_select %p37, %s38, %s39
      %p43 = pneg %p37
      %p44 = scmp.eq.s32.totalorder %s14, 1
      %p45 = por %p43, %p44
      %p46 = scmp.ne.s32.totalorder %s38, %s41
      %p47 = scmp.eq.s32.totalorder %s14, 0
      %p48 = por %p46, %p47
      %p49 = scmp.ne.s32.totalorder %s38, %s41
      %p50 = scmp.eq.s32.totalorder %s19, 1
      %p51 = por %p49, %p50
      %p52 = scmp.ne.s32.totalorder %s41, %s42
      %p53 = scmp.eq.s32.totalorder %s19, 0
      %p54 = por %p52, %p53
      %p55 = scmp.ne.s32.totalorder %s41, %s42
      %p56 = scmp.eq.s32.totalorder %s20, 1
      %p57 = por %p55, %p56
      %p59 = scmp.ne.s32.totalorder %s42, %s58
      %p60 = scmp.eq.s32.totalorder %s20, 0
      %p61 = por %p59, %p60
      %s62 = ssub.s32 %s21, %s33
      %p63 = scmp.eq.s32.totalorder %s62, 0
      %s65 = sadd.s32 %s64, 1
      %s66 = scalar_select %p63, %s64, %s65
      %p69 = pneg %p63
      %p70 = scmp.eq.s32.totalorder %s14, 1
      %p71 = por %p69, %p70
      %p72 = scmp.ne.s32.totalorder %s64, %s67
      %p73 = scmp.eq.s32.totalorder %s14, 0
      %p74 = por %p72, %p73
      %p75 = scmp.ne.s32.totalorder %s64, %s67
      %p76 = scmp.eq.s32.totalorder %s19, 1
      %p77 = por %p75, %p76
      %p78 = scmp.ne.s32.totalorder %s67, %s68
      %p79 = scmp.eq.s32.totalorder %s19, 0
      %p80 = por %p78, %p79
      %p81 = scmp.ne.s32.totalorder %s67, %s68
      %p82 = scmp.eq.s32.totalorder %s20, 1
      %p83 = por %p81, %p82
      %p85 = scmp.ne.s32.totalorder %s68, %s84
      %p86 = scmp.eq.s32.totalorder %s20, 0
      %p87 = por %p85, %p86
      %s89 = sadd.s32 %s88, 1
      %p92 = scmp.eq.s32.totalorder %s14, 1
      %p93 = scmp.ne.s32.totalorder %s88, %s90
      %p94 = scmp.eq.s32.totalorder %s14, 0
      %p95 = por %p93, %p94
      %p96 = scmp.ne.s32.totalorder %s88, %s90
      %p97 = scmp.eq.s32.totalorder %s19, 1
      %p98 = por %p96, %p97
      %p99 = scmp.ne.s32.totalorder %s90, %s91
      %p100 = scmp.eq.s32.totalorder %s19, 0
      %p101 = por %p99, %p100
      %p102 = scmp.ne.s32.totalorder %s90, %s91
      %p103 = scmp.eq.s32.totalorder %s20, 1
      %p104 = por %p102, %p103
      %p106 = scmp.ne.s32.totalorder %s91, %s105
      %p107 = scmp.eq.s32.totalorder %s20, 0
      %p108 = por %p106, %p107
      %s110 = sadd.s32 %s109, 1
      %p113 = scmp.eq.s32.totalorder %s14, 1
      %p114 = scmp.ne.s32.totalorder %s109, %s111
      %p115 = scmp.eq.s32.totalorder %s14, 0
      %p116 = por %p114, %p115
      %p117 = scmp.ne.s32.totalorder %s109, %s111
      %p118 = scmp.eq.s32.totalorder %s19, 1
      %p119 = por %p117, %p118
      %p120 = scmp.ne.s32.totalorder %s111, %s112
      %p121 = scmp.eq.s32.totalorder %s19, 0
      %p122 = por %p120, %p121
      %p123 = scmp.ne.s32.totalorder %s111, %s112
      %p124 = scmp.eq.s32.totalorder %s20, 1
      %p125 = por %p123, %p124
      %p127 = scmp.ne.s32.totalorder %s112, %s126
      %p128 = scmp.eq.s32.totalorder %s20, 0
      %p129 = por %p127, %p128
      %s131 = sadd.s32 %s130, 1
      %p134 = scmp.eq.s32.totalorder %s14, 1
      %p135 = scmp.ne.s32.totalorder %s130, %s132
      %p136 = scmp.eq.s32.totalorder %s14, 0
      %p137 = por %p135, %p136
      %p138 = scmp.ne.s32.totalorder %s130, %s132
      %p139 = scmp.eq.s32.totalorder %s19, 1
      %p140 = por %p138, %p139
      %p141 = scmp.ne.s32.totalorder %s132, %s133
      %p142 = scmp.eq.s32.totalorder %s19, 0
      %p143 = por %p141, %p142
      %p144 = scmp.ne.s32.totalorder %s132, %s133
      %p145 = scmp.eq.s32.totalorder %s20, 1
      %p146 = por %p144, %p145
      %p148 = scmp.ne.s32.totalorder %s133, %s147
      %p149 = scmp.eq.s32.totalorder %s20, 0
      %p150 = por %p148, %p149
      %s151 = ssub.s32 %s21, %s33
      %s152 = ssub.s32 %s22, %s29
      %s153 = sor.u32 %s151, %s152
      %p154 = scmp.eq.s32.totalorder %s153, 0
      %s156 = sadd.s32 %s155, 1
      %s157 = scalar_select %p154, %s155, %s156
      %p160 = pneg %p154
      %p161 = scmp.eq.s32.totalorder %s14, 1
      %p162 = por %p160, %p161
      %p163 = scmp.ne.s32.totalorder %s155, %s158
      %p164 = scmp.eq.s32.totalorder %s14, 0
      %p165 = por %p163, %p164
      %p166 = scmp.ne.s32.totalorder %s155, %s158
      %p167 = scmp.eq.s32.totalorder %s19, 1
      %p168 = por %p166, %p167
      %p169 = scmp.ne.s32.totalorder %s158, %s159
      %p170 = scmp.eq.s32.totalorder %s19, 0
      %p171 = por %p169, %p170
      %p172 = scmp.ne.s32.totalorder %s158, %s159
      %p173 = scmp.eq.s32.totalorder %s20, 1
      %p174 = por %p172, %p173
      %p176 = scmp.ne.s32.totalorder %s159, %s175
      %p177 = scmp.eq.s32.totalorder %s20, 0
      %p178 = por %p176, %p177
      %p179 = scmp.le.s32.totalorder 1, %s14
      %p180 = scmp.lt.s32.totalorder %s14, 3
      %p181 = pnand %p179, %p180
      %p182 = pneg %p181
      // Predicated region
      $region9: #{dc_forward.1} parent=5 // pred_check
        _
      $region10: #{dc_forward.1} parent=5 // pred_check_branch
        %184 = sbr.rel (%p181) target = $region12
      $region11: #{dc_forward.1} parent=5 // pred_region
        %s185 = ssub.s32 %s14, 1
        // Predicated region
        $region13: #{dc_forward.1} parent=11 // pred_check
          %p186 = pneg %p101
        $region14: #{dc_forward.1} parent=11 // pred_check_branch
          %188 = sbr.rel (%p186) target = $region16
        $region15: #{dc_forward.1} parent=11 // pred_region
          _
        $region16: #{dc_forward.1} parent=11 // pred_fallthru
          _
        // Predicated region
        $region17: #{dc_forward.1} parent=11 // pred_check
          %p189 = pneg %p122
        $region18: #{dc_forward.1} parent=11 // pred_check_branch
          %191 = sbr.rel (%p189) target = $region20
        $region19: #{dc_forward.1} parent=11 // pred_region
          _
        $region20: #{dc_forward.1} parent=11 // pred_fallthru
          _
        // Predicated region
        $region21: #{dc_forward.1} parent=11 // pred_check
          %p192 = pneg %p143
        $region22: #{dc_forward.1} parent=11 // pred_check_branch
          %194 = sbr.rel (%p192) target = $region24
        $region23: #{dc_forward.1} parent=11 // pred_region
          _
        $region24: #{dc_forward.1} parent=11 // pred_fallthru
          _
      $region12: #{dc_forward.1} parent=5 // pred_fallthru
        _
      %p195 = scmp.lt.s32.totalorder %s14, 2
      // Predicated region
      $region25: #{dc_forward.1} parent=5 // pred_check
        %p196 = pneg %p195
      $region26: #{dc_forward.1} parent=5 // pred_check_branch
        %198 = sbr.rel (%p196) target = $region28
      $region27: #{dc_forward.1} parent=5 // pred_region
        // Predicated region
        $region29: #{dc_forward.1} parent=27 // pred_check
          %p199 = pneg %p48
        $region30: #{dc_forward.1} parent=27 // pred_check_branch
          %201 = sbr.rel (%p199) target = $region32
        $region31: #{dc_forward.1} parent=27 // pred_region
          %p202 = scmp.lt.s32.totalorder %s21, 1
          %s203 = scalar_select %p202, %s21, 1
          %p204 = scmp.lt.s32.totalorder %s22, 0
          %s205 = scalar_select %p204, %s22, 0
          %s206 = sadd.s32 %s205, %s203
          %s207 = smul.addr %s206, 4
          %s208 = scalar_lea.vmem %s0, %s207
        $region32: #{dc_forward.1} parent=27 // pred_fallthru
          _
        // Predicated region
        $region33: #{dc_forward.1} parent=27 // pred_check
          %p209 = pneg %p74
        $region34: #{dc_forward.1} parent=27 // pred_check_branch
          %211 = sbr.rel (%p209) target = $region36
        $region35: #{dc_forward.1} parent=27 // pred_region
          %p212 = scmp.lt.s32.totalorder %s21, 1
          %s213 = scalar_select %p212, %s21, 1
          %s214 = smul.addr %s213, 16
          %s215 = smul.addr %s214, 8
          %s216 = scalar_lea.vmem %s1, %s215
        $region36: #{dc_forward.1} parent=27 // pred_fallthru
          _
      $region28: #{dc_forward.1} parent=5 // pred_fallthru
        _
      %p217 = scmp.le.s32.totalorder 1, %s14
      %p218 = scmp.lt.s32.totalorder %s14, 3
      %p219 = pnand %p217, %p218
      %p220 = pneg %p219
      // Predicated region
      $region37: #{dc_forward.1} parent=5 // pred_check
        _
      $region38: #{dc_forward.1} parent=5 // pred_check_branch
        %222 = sbr.rel (%p219) target = $region40
      $region39: #{dc_forward.1} parent=5 // pred_region
        %s223 = ssub.s32 %s14, 1
        %p224 = scmp.lt.s32.totalorder %s23, 1
        %s225 = scalar_select %p224, %s23, 1
        %p226 = scmp.lt.s32.totalorder %s24, 0
        %s227 = scalar_select %p226, %s24, 0
        %s228 = sadd.s32 %s227, %s225
        %s229 = smul.addr %s228, 4
        %s230 = scalar_lea.vmem %s0, %s229
        %p231 = pneg %p54
        %p232 = pneg %p51
        %p233 = scmp.lt.s32.totalorder %s23, 1
        %s234 = scalar_select %p233, %s23, 1
        %s235 = smul.addr %s234, 16
        %s236 = smul.addr %s235, 8
        %s237 = scalar_lea.vmem %s1, %s236
        %p238 = pneg %p80
        %p239 = pneg %p77
        %p240 = pneg %p101
        %p241 = pneg %p98
        %p242 = pneg %p122
        %p243 = pneg %p119
        %p244 = pneg %p143
        %p245 = pneg %p140
        %p246 = pneg %p171
        %p247 = pneg %p168
        %s248 = sand.u32 %s158, 1
        %s249 = scalar_lea.sflag [#allocation3], %s248
        %s250 = sand.u32 %s158, 1
        %s251 = smul.addr %s250, 4
        %s252 = scalar_lea.vmem [#allocation2], %s251
        %p253 = scmp.lt.s32.totalorder %s23, 1
        %s254 = scalar_select %p253, %s23, 1
        %p255 = scmp.lt.s32.totalorder %s24, 0
        %s256 = scalar_select %p255, %s24, 0
        %s257 = sadd.s32 %s256, %s254
        %s258 = smul.addr %s257, 4
        %s259 = scalar_lea.vmem %s0, %s258
        %p260 = scmp.lt.s32.totalorder %s23, 1
        %s261 = scalar_select %p260, %s23, 1
        %s262 = smul.addr %s261, 16
        %s263 = smul.addr %s262, 8
        %s264 = scalar_lea.vmem %s1, %s263
        %v266 = vld [vmem:[%s2] sm:$0xff]
        %v267 = vld [vmem:[%s2 + $0x8] sm:$0xff]
        %v268 = vld [vmem:[%s2 + $0x10] sm:$0xff]
        %v269 = vld [vmem:[%s2 + $0x18] sm:$0xff]
        %v270 = vld [vmem:[%s2 + $0x20] sm:$0xff]
        %v271 = vld [vmem:[%s2 + $0x28] sm:$0xff]
        %v272 = vld [vmem:[%s2 + $0x30] sm:$0xff]
        %v273 = vld [vmem:[%s2 + $0x38] sm:$0xff]
        %v274 = vld [vmem:[%s2 + $0x40] sm:$0xff]
        %v275 = vld [vmem:[%s2 + $0x48] sm:$0xff]
        %v276 = vld [vmem:[%s2 + $0x50] sm:$0xff]
        %v277 = vld [vmem:[%s2 + $0x58] sm:$0xff]
        %v278 = vld [vmem:[%s2 + $0x60] sm:$0xff]
        %v279 = vld [vmem:[%s2 + $0x68] sm:$0xff]
        %v280 = vld [vmem:[%s2 + $0x70] sm:$0xff]
        %v281 = vld [vmem:[%s2 + $0x78] sm:$0xff]
        %v282 = vld [vmem:[%s4] sm:$0xf]
        %v283 = vld [vmem:[%s3] sm:$0xf]
        %v284 = vpack.c.bf16 %v283, %v283
        %v285 = vld [vmem:[%s259] sm:$0xf]
        %v286 = vmul.f32 %v285, %v285
        %v287 = vmul.f32 %v285, %v286
        %v288 = vld [vmem:[%s264] sm:$0xff]
        %v289 = vld [vmem:[%s264 + $0x8] sm:$0xff]
        %v290 = vld [vmem:[%s264 + $0x10] sm:$0xff]
        %v291 = vld [vmem:[%s264 + $0x18] sm:$0xff]
        %v292 = vld [vmem:[%s264 + $0x20] sm:$0xff]
        %v293 = vld [vmem:[%s264 + $0x28] sm:$0xff]
        %v294 = vld [vmem:[%s264 + $0x30] sm:$0xff]
        %v295 = vld [vmem:[%s264 + $0x38] sm:$0xff]
        %v296 = vld [vmem:[%s264 + $0x40] sm:$0xff]
        %v297 = vld [vmem:[%s264 + $0x48] sm:$0xff]
        %v298 = vld [vmem:[%s264 + $0x50] sm:$0xff]
        %v299 = vld [vmem:[%s264 + $0x58] sm:$0xff]
        %v300 = vld [vmem:[%s264 + $0x60] sm:$0xff]
        %v301 = vld [vmem:[%s264 + $0x68] sm:$0xff]
        %v302 = vld [vmem:[%s264 + $0x70] sm:$0xff]
        %v303 = vld [vmem:[%s264 + $0x78] sm:$0xff]
        %v304 = vpack.c.bf16 %v289, %v288
        %v305 = vpack.c.bf16 %v291, %v290
        %v306 = vpack.c.bf16 %v293, %v292
        %v307 = vpack.c.bf16 %v295, %v294
        %v308 = vpack.c.bf16 %v297, %v296
        %v309 = vpack.c.bf16 %v299, %v298
        %v310 = vpack.c.bf16 %v301, %v300
        %v311 = vpack.c.bf16 %v303, %v302
        %v312 = vpack.c.bf16 %v287, %v287
        %314 = vset.pattern.permute.xlu0 0
        %315 = vperm.xlu0 %314, %v266
        %v316 = vpop.permute.xlu0 %315
        %319 = vset.pattern.permute.xlu0 0
        %320 = vperm.xlu0 %319, %v267
        %v321 = vpop.permute.xlu0 %320
        %324 = vset.pattern.permute.xlu0 0
        %325 = vperm.xlu0 %324, %v268
        %v326 = vpop.permute.xlu0 %325
        %329 = vset.pattern.permute.xlu0 0
        %330 = vperm.xlu0 %329, %v269
        %v331 = vpop.permute.xlu0 %330
        %334 = vset.pattern.permute.xlu0 0
        %335 = vperm.xlu0 %334, %v270
        %v336 = vpop.permute.xlu0 %335
        %339 = vset.pattern.permute.xlu0 0
        %340 = vperm.xlu0 %339, %v271
        %v341 = vpop.permute.xlu0 %340
        %344 = vset.pattern.permute.xlu0 0
        %345 = vperm.xlu0 %344, %v272
        %v346 = vpop.permute.xlu0 %345
        %349 = vset.pattern.permute.xlu0 0
        %350 = vperm.xlu0 %349, %v273
        %v351 = vpop.permute.xlu0 %350
        %354 = vset.pattern.permute.xlu0 0
        %355 = vperm.xlu0 %354, %v274
        %v356 = vpop.permute.xlu0 %355
        %359 = vset.pattern.permute.xlu0 0
        %360 = vperm.xlu0 %359, %v275
        %v361 = vpop.permute.xlu0 %360
        %364 = vset.pattern.permute.xlu0 0
        %365 = vperm.xlu0 %364, %v276
        %v366 = vpop.permute.xlu0 %365
        %369 = vset.pattern.permute.xlu0 0
        %370 = vperm.xlu0 %369, %v277
        %v371 = vpop.permute.xlu0 %370
        %374 = vset.pattern.permute.xlu0 0
        %375 = vperm.xlu0 %374, %v278
        %v376 = vpop.permute.xlu0 %375
        %379 = vset.pattern.permute.xlu0 0
        %380 = vperm.xlu0 %379, %v279
        %v381 = vpop.permute.xlu0 %380
        %384 = vset.pattern.permute.xlu0 0
        %385 = vperm.xlu0 %384, %v280
        %v386 = vpop.permute.xlu0 %385
        %389 = vset.pattern.permute.xlu0 0
        %390 = vperm.xlu0 %389, %v281
        %v391 = vpop.permute.xlu0 %390
        %vm393 = vcmask 31744
        %v395 = vsel %vm393, %v304, 0
        %v398 = vsel %vm393, %v305, 0
        %v401 = vsel %vm393, %v306, 0
        %v404 = vsel %vm393, %v307, 0
        %v407 = vsel %vm393, %v308, 0
        %v410 = vsel %vm393, %v309, 0
        %v413 = vsel %vm393, %v310, 0
        %v416 = vsel %vm393, %v311, 0
        %vm418 = vcmask 1041408
        %v420 = vsel %vm418, %v312, 0
        %422 = vmatpush.bf16.msra.mxu0 0
        %423 = vmatpush.bf16.msra.mxu0 0
        %424 = vmatpush.bf16.msra.mxu0 0
        %425 = vmatpush.bf16.msra.mxu0 0
        %426 = vmatpush.bf16.msra.mxu0 0
        %427 = vmatpush.bf16.msra.mxu0 0
        %428 = vmatpush.bf16.msra.mxu0 0
        %429 = vmatpush.bf16.msra.mxu0 %v420
        %430 = vmatmul.bf16.gmra.mxu0 %v395
        %v431 = vpop.f32.mrf.mxu0
        %v432 = vadd.f32 %v316, %v431
        %v433 = vpop.f32.mrf.mxu0
        %v434 = vadd.f32 %v321, %v433
        %435 = vmatmul.bf16.gmra.mxu0 %v398
        %v436 = vpop.f32.mrf.mxu0
        %v437 = vadd.f32 %v326, %v436
        %v438 = vpop.f32.mrf.mxu0
        %v439 = vadd.f32 %v331, %v438
        %440 = vmatmul.bf16.gmra.mxu0 %v401
        %v441 = vpop.f32.mrf.mxu0
        %v442 = vadd.f32 %v336, %v441
        %v443 = vpop.f32.mrf.mxu0
        %v444 = vadd.f32 %v341, %v443
        %445 = vmatmul.bf16.gmra.mxu0 %v404
        %v446 = vpop.f32.mrf.mxu0
        %v447 = vadd.f32 %v346, %v446
        %v448 = vpop.f32.mrf.mxu0
        %v449 = vadd.f32 %v351, %v448
        %450 = vmatmul.bf16.gmra.mxu0 %v407
        %v451 = vpop.f32.mrf.mxu0
        %v452 = vadd.f32 %v356, %v451
        %v453 = vpop.f32.mrf.mxu0
        %v454 = vadd.f32 %v361, %v453
        %455 = vmatmul.bf16.gmra.mxu0 %v410
        %v456 = vpop.f32.mrf.mxu0
        %v457 = vadd.f32 %v366, %v456
        %v458 = vpop.f32.mrf.mxu0
        %v459 = vadd.f32 %v371, %v458
        %460 = vmatmul.bf16.gmra.mxu0 %v413
        %v461 = vpop.f32.mrf.mxu0
        %v462 = vadd.f32 %v376, %v461
        %v463 = vpop.f32.mrf.mxu0
        %v464 = vadd.f32 %v381, %v463
        %465 = vmatmul.bf16.gmra.mxu0 %v416
        %v466 = vpop.f32.mrf.mxu0
        %v467 = vadd.f32 %v386, %v466
        %v468 = vpop.f32.mrf.mxu0
        %v469 = vadd.f32 %v391, %v468
        %470 = vdwg.mxu0
        %v471 = vtanh.pop %v432
        %v472 = vtanh.pop %v434
        %v473 = vtanh.pop %v437
        %v474 = vtanh.pop %v439
        %v475 = vtanh.pop %v442
        %v476 = vtanh.pop %v444
        %v477 = vtanh.pop %v447
        %v478 = vtanh.pop %v449
        %v479 = vtanh.pop %v452
        %v480 = vtanh.pop %v454
        %v481 = vtanh.pop %v457
        %v482 = vtanh.pop %v459
        %v483 = vtanh.pop %v462
        %v484 = vtanh.pop %v464
        %v485 = vtanh.pop %v467
        %v486 = vtanh.pop %v469
        %v487 = vpack.c.bf16 %v472, %v471
        %v488 = vpack.c.bf16 %v474, %v473
        %v489 = vpack.c.bf16 %v476, %v475
        %v490 = vpack.c.bf16 %v478, %v477
        %v491 = vpack.c.bf16 %v480, %v479
        %v492 = vpack.c.bf16 %v482, %v481
        %v493 = vpack.c.bf16 %v484, %v483
        %v494 = vpack.c.bf16 %v486, %v485
        %496 = vset.pattern.permute.xlu0 0
        %497 = vperm.xlu0 %496, %v282
        %v498 = vpop.permute.xlu0 %497
        %500 = vmatpush.bf16.msra.mxu0 %v494
        %501 = vmatpush.bf16.msra.mxu0 %v493
        %502 = vmatpush.bf16.msra.mxu0 %v492
        %503 = vmatpush.bf16.msra.mxu0 %v491
        %504 = vmatpush.bf16.msra.mxu0 %v490
        %505 = vmatpush.bf16.msra.mxu0 %v489
        %506 = vmatpush.bf16.msra.mxu0 %v488
        %507 = vmatpush.bf16.msra.mxu0 %v487
        %508 = vmatmul.bf16.gmra.mxu0 %v284
        %v509 = vpop.f32.mrf.mxu0
        %v510 = vadd.f32 %v498, %v509
        %v511 = vpop.f32.mrf.mxu0
        %512 = vdwg.mxu0
        %vm513 = vcmask 60416
        %514 = vst.msk [vmem:[%s252] sm:$0xf] %vm513, %v510
        %s515 = sand.u32 %s158, 1
        %s516 = scalar_lea.sflag [#allocation3], %s515
        %s517 = sand.u32 %s158, 1
        %s518 = smul.addr %s517, 4
        %s519 = scalar_lea.vmem [#allocation2], %s518
        // Predicated region
        $region41: #{dc_forward.1} parent=39 // pred_check
          %p520 = pneg %p168
        $region42: #{dc_forward.1} parent=39 // pred_check_branch
          %522 = sbr.rel (%p520) target = $region44
        $region43: #{dc_forward.1} parent=39 // pred_region
          %524 = vsyncadd %s516, 0
          %s525 = sadd.s32 %s24, %s23
          %s526 = smul.addr %s525, 4
          %s527 = scalar_lea.hbm %s5, %s526
          %s529 = sshll.u32 %s519, 4
          %s530 = int_to_ptr.vmem [resolvable:$true] %s529
          %s531 = sshll.u32 %s527, 4
          %s532 = int_to_ptr.hbm [resolvable:$true] %s531
          %534 = dma.vmem_to_hbm [thread:$0]  %s530, 64, %s532, %s516
        $region44: #{dc_forward.1} parent=39 // pred_fallthru
          _
      $region40: #{dc_forward.1} parent=5 // pred_fallthru
        _
      %p535 = scmp.le.s32.totalorder 2, %s14
      // Predicated region
      $region45: #{dc_forward.1} parent=5 // pred_check
        %p536 = pneg %p535
      $region46: #{dc_forward.1} parent=5 // pred_check_branch
        %538 = sbr.rel (%p536) target = $region48
      $region47: #{dc_forward.1} parent=5 // pred_region
        %s539 = ssub.s32 %s14, 2
        // Predicated region
        $region49: #{dc_forward.1} parent=47 // pred_check
          %p540 = pneg %p174
        $region50: #{dc_forward.1} parent=47 // pred_check_branch
          %542 = sbr.rel (%p540) target = $region52
        $region51: #{dc_forward.1} parent=47 // pred_region
          %s543 = sand.u32 %s159, 1
          %s544 = scalar_lea.sflag [#allocation3], %s543
          %s545 = sand.u32 %s159, 1
          %s546 = smul.addr %s545, 4
          %s547 = scalar_lea.vmem [#allocation2], %s546
          %549 = dma.done %s544, 64
        $region52: #{dc_forward.1} parent=47 // pred_fallthru
          _
      $region48: #{dc_forward.1} parent=5 // pred_fallthru
        _
    $region6: #{dc_forward.1} parent=1 // loop_footer
      %s18 = sadd.s32 1, %s14
    $region7: #{dc_forward.1} parent=1 // loop_footer_branch
      %13 = sbr.rel target = $region3
    $region8: #{dc_forward.1} parent=1 // loop_exit
      _
    %550 = vsyncpa [#allocation3], 1
    %s551 = scalar_lea.sflag [#allocation3], 1
    %552 = vsyncpa %s551, 1

</llo_original>
